<compile_context>
chip_gen: v7x
topology: tpu7x:2x2x1
jax: 0.10.0
libtpu: 0.0.40
codegen_flags: <defaults>
</compile_context>

<pallas_src>
import functools

import jax
import jax.numpy as jnp
import numpy as np
from jax.experimental import pallas as pl
from jax.experimental.pallas import tpu as pltpu

HIDDEN = 128
HEAD_LANES = 128  # fused (logits | value) head padded to a full lane width


def _round_up(x, m):
    return ((x + m - 1) // m) * m


def _choose_tb(batch):
    """Batch tile: big enough to amortize per-step overhead, >=2 blocks for
    megacore when batch > 64, multiple of 8 (sublane) / 16 (bf16-friendly)."""
    if batch <= 64:
        return max(8, _round_up(batch, 8))
    tb = _round_up(pl.cdiv(batch, 2), 16)
    return min(1024, tb)


def actor_critic_kernel(x_ref, w1_ref, b1_ref, w2_ref, b2_ref,
                        wh_ref, bh_ref, out_ref):
    x = x_ref[...]                              # (TB, K) f32, K tiny (8)
    w1 = w1_ref[...]                            # (K, 128) f32
    k_dim = x.shape[1]

    # fc1 on the VPU: K is tiny, so unrolled broadcast MACs beat an MXU push
    # whose cost scales with TB regardless of K.
    acc = x[:, 0:1] * w1[0:1, :]
    for k in range(1, k_dim):                   # static unroll (K = 8)
        acc = acc + x[:, k:k + 1] * w1[k:k + 1, :]
    h1 = jnp.maximum(acc + b1_ref[...], 0.0)    # (TB, 128) f32

    # fc2 + relu: bf16 MXU operands, f32 accumulate, f32 bias/ReLU on the VPU.
    h2 = jnp.dot(h1.astype(jnp.bfloat16), w2_ref[...],
                 preferred_element_type=jnp.float32) + b2_ref[...]
    h2 = jnp.maximum(h2, 0.0)

    # Fused (logits | value) head: one bf16 MXU push, one unmasked lane-dense
    # (TB, 128) f32 store.
    out_ref[...] = jnp.dot(h2.astype(jnp.bfloat16), wh_ref[...],
                           preferred_element_type=jnp.float32) + bh_ref[...]


@functools.partial(jax.jit, static_argnames=("action_space",))
def _actor_critic_call(x, w1, b1, w2, b2, wh, bh, *, action_space):
    B, input_dim = x.shape
    TB = _choose_tb(B)
    grid = (pl.cdiv(B, TB),)                    # ragged final block is masked

    in_specs = [
        pl.BlockSpec((TB, input_dim), lambda i: (i, 0)),        # x: per-row block
        pl.BlockSpec((input_dim, HIDDEN), lambda i: (0, 0)),    # w1 (f32, VPU)
        pl.BlockSpec((1, HIDDEN), lambda i: (0, 0)),            # b1
        pl.BlockSpec((HIDDEN, HIDDEN), lambda i: (0, 0)),       # w2 (bf16, MXU)
        pl.BlockSpec((1, HIDDEN), lambda i: (0, 0)),            # b2
        pl.BlockSpec((HIDDEN, HEAD_LANES), lambda i: (0, 0)),   # fused head w (bf16)
        pl.BlockSpec((1, HEAD_LANES), lambda i: (0, 0)),        # fused head b
    ]
    out_specs = pl.BlockSpec((TB, HEAD_LANES), lambda i: (i, 0))

    head_out = pl.pallas_call(
        actor_critic_kernel,
        grid=grid,
        in_specs=in_specs,
        out_specs=out_specs,
        out_shape=jax.ShapeDtypeStruct((B, HEAD_LANES), jnp.float32),
        compiler_params=pltpu.CompilerParams(
            dimension_semantics=("parallel",)),
    )(x, w1, b1, w2, b2, wh, bh)

    logits = head_out[:, :action_space]
    value = head_out[:, action_space:action_space + 1]
    return logits, value


def prepare_params(params):
    """One-time param prep: fuse + lane-pad the two heads and cast the MXU
    weights to bf16.  Done once, outside the per-call path."""
    wh = jnp.concatenate([params["wl"], params["wv"]], axis=1)
    bh = jnp.concatenate([params["bl"], params["bv"]], axis=1)
    pad = HEAD_LANES - wh.shape[1]
    wh = jnp.pad(wh, ((0, 0), (0, pad)))
    bh = jnp.pad(bh, ((0, 0), (0, pad)))
    return dict(
        w1=params["w1"].astype(jnp.float32),     # fc1 runs on the VPU in f32
        b1=params["b1"].astype(jnp.float32),
        w2=params["w2"].astype(jnp.bfloat16),    # MXU operands in bf16
        b2=params["b2"].astype(jnp.float32),
        wh=wh.astype(jnp.bfloat16),
        bh=bh.astype(jnp.float32),
        action_space=int(params["wl"].shape[1]),
    )


def actor_critic_forward(x, prepared):
    """x: (B, input_dim) f32. prepared: output of prepare_params."""
    return _actor_critic_call(x, prepared["w1"], prepared["b1"],
                              prepared["w2"], prepared["b2"],
                              prepared["wh"], prepared["bh"],
                              action_space=prepared["action_space"])


def init_params(key, input_dim, action_space, hidden=HIDDEN):
    """Deterministic init mimicking PyTorch nn.Linear default (U[-1/sqrt(fan_in), +])."""
    def linear(k, fan_in, fan_out):
        kw, kb = jax.random.split(k)
        bound = 1.0 / np.sqrt(fan_in)
        w = jax.random.uniform(kw, (fan_in, fan_out), jnp.float32, -bound, bound)
        b = jax.random.uniform(kb, (1, fan_out), jnp.float32, -bound, bound)
        return w, b

    k1, k2, k3, k4 = jax.random.split(key, 4)
    w1, b1 = linear(k1, input_dim, hidden)
    w2, b2 = linear(k2, hidden, hidden)
    wl, bl = linear(k3, hidden, action_space)
    wv, bv = linear(k4, hidden, 1)
    return dict(w1=w1, b1=b1, w2=w2, b2=b2, wl=wl, bl=bl, wv=wv, bv=bv)


def reference_forward(x, p):
    h1 = jnp.maximum(x @ p["w1"] + p["b1"], 0.0)
    h2 = jnp.maximum(h1 @ p["w2"] + p["b2"], 0.0)
    return h2 @ p["wl"] + p["bl"], h2 @ p["wv"] + p["bv"]


if __name__ == "__main__":
    # LunarLander-v2: observation dim 8, action space 4.
    input_dim, action_space, batch = 8, 4, 8

    key = jax.random.PRNGKey(0)
    k_params, k_x = jax.random.split(key)
    params = init_params(k_params, input_dim, action_space)
    prepared = prepare_params(params)

    # bf16 MXU operands -> relaxed tolerance vs. the f32 reference.
    RTOL, ATOL = 2e-2, 2e-2

    x = jax.random.normal(k_x, (batch, input_dim), dtype=jnp.float32)
    logits, value = jax.block_until_ready(actor_critic_forward(x, prepared))

    ref_logits, ref_value = reference_forward(x, params)
    np.testing.assert_allclose(np.asarray(logits), np.asarray(ref_logits),
                               rtol=RTOL, atol=ATOL)
    np.testing.assert_allclose(np.asarray(value), np.asarray(ref_value),
                               rtol=RTOL, atol=ATOL)
    assert logits.shape == (batch, action_space)
    assert value.shape == (batch, 1)

    # Exercise the multi-block (megacore) gridded path with a larger,
    # non-aligned batch (ragged final block, no host-side padding).
    xb = jax.random.normal(jax.random.PRNGKey(1), (1000, input_dim), jnp.float32)
    lb, vb = jax.block_until_ready(actor_critic_forward(xb, prepared))
    rlb, rvb = reference_forward(xb, params)
    np.testing.assert_allclose(np.asarray(lb), np.asarray(rlb), rtol=RTOL, atol=ATOL)
    np.testing.assert_allclose(np.asarray(vb), np.asarray(rvb), rtol=RTOL, atol=ATOL)
    assert lb.shape == (1000, action_space) and vb.shape == (1000, 1)

    print("KERNEL_OK")
</pallas_src>

<mosaic_0001>
module attributes {stable_mosaic.version = 11 : i64} {
  func.func @actor_critic_kernel(%arg0: i32, %arg1: memref<8x8xf32, #tpu.memory_space<vmem>>, %arg2: memref<8x128xf32, #tpu.memory_space<vmem>>, %arg3: memref<1x128xf32, #tpu.memory_space<vmem>>, %arg4: memref<128x128xbf16, #tpu.memory_space<vmem>>, %arg5: memref<1x128xf32, #tpu.memory_space<vmem>>, %arg6: memref<128x128xbf16, #tpu.memory_space<vmem>>, %arg7: memref<1x128xf32, #tpu.memory_space<vmem>>, %arg8: memref<8x128xf32, #tpu.memory_space<vmem>>) attributes {dimension_semantics = [#tpu.dimension_semantics<parallel>], iteration_bounds = array<i64: 1>, scalar_prefetch = 0 : i64, scratch_operands = 0 : i64, tpu.core_type = #tpu.core_type<tc>, window_params = [{transform_indices = @transform_0, window_bounds = array<i64: 8, 8>}, {pipeline_mode = #tpu.pipeline_mode<synchronous>, transform_indices = @transform_1, window_bounds = array<i64: 8, 128>}, {pipeline_mode = #tpu.pipeline_mode<synchronous>, transform_indices = @transform_2, window_bounds = array<i64: 1, 128>}, {pipeline_mode = #tpu.pipeline_mode<synchronous>, transform_indices = @transform_3, window_bounds = array<i64: 128, 128>}, {pipeline_mode = #tpu.pipeline_mode<synchronous>, transform_indices = @transform_4, window_bounds = array<i64: 1, 128>}, {pipeline_mode = #tpu.pipeline_mode<synchronous>, transform_indices = @transform_5, window_bounds = array<i64: 128, 128>}, {pipeline_mode = #tpu.pipeline_mode<synchronous>, transform_indices = @transform_6, window_bounds = array<i64: 1, 128>}, {transform_indices = @transform_7, window_bounds = array<i64: 8, 128>}]} {
    %c0 = arith.constant 0 : index
    %c0_0 = arith.constant 0 : index
    %0 = vector.load %arg1[%c0, %c0_0] : memref<8x8xf32, #tpu.memory_space<vmem>>, vector<8x8xf32>
    %c0_1 = arith.constant 0 : index
    %c0_2 = arith.constant 0 : index
    %1 = vector.load %arg2[%c0_1, %c0_2] : memref<8x128xf32, #tpu.memory_space<vmem>>, vector<8x128xf32>
    %2 = vector.extract_strided_slice %0 {offsets = [0, 0], sizes = [8, 1], strides = [1, 1]} : vector<8x8xf32> to vector<8x1xf32>
    %3 = vector.extract_strided_slice %1 {offsets = [0, 0], sizes = [1, 128], strides = [1, 1]} : vector<8x128xf32> to vector<1x128xf32>
    %4 = vector.broadcast %2 : vector<8x1xf32> to vector<8x128xf32>
    %5 = vector.broadcast %3 : vector<1x128xf32> to vector<8x128xf32>
    %6 = arith.mulf %4, %5 : vector<8x128xf32>
    %7 = vector.extract_strided_slice %0 {offsets = [0, 1], sizes = [8, 1], strides = [1, 1]} : vector<8x8xf32> to vector<8x1xf32>
    %8 = vector.extract_strided_slice %1 {offsets = [1, 0], sizes = [1, 128], strides = [1, 1]} : vector<8x128xf32> to vector<1x128xf32>
    %9 = vector.broadcast %7 : vector<8x1xf32> to vector<8x128xf32>
    %10 = vector.broadcast %8 : vector<1x128xf32> to vector<8x128xf32>
    %11 = arith.mulf %9, %10 : vector<8x128xf32>
    %12 = arith.addf %6, %11 : vector<8x128xf32>
    %13 = vector.extract_strided_slice %0 {offsets = [0, 2], sizes = [8, 1], strides = [1, 1]} : vector<8x8xf32> to vector<8x1xf32>
    %14 = vector.extract_strided_slice %1 {offsets = [2, 0], sizes = [1, 128], strides = [1, 1]} : vector<8x128xf32> to vector<1x128xf32>
    %15 = vector.broadcast %13 : vector<8x1xf32> to vector<8x128xf32>
    %16 = vector.broadcast %14 : vector<1x128xf32> to vector<8x128xf32>
    %17 = arith.mulf %15, %16 : vector<8x128xf32>
    %18 = arith.addf %12, %17 : vector<8x128xf32>
    %19 = vector.extract_strided_slice %0 {offsets = [0, 3], sizes = [8, 1], strides = [1, 1]} : vector<8x8xf32> to vector<8x1xf32>
    %20 = vector.extract_strided_slice %1 {offsets = [3, 0], sizes = [1, 128], strides = [1, 1]} : vector<8x128xf32> to vector<1x128xf32>
    %21 = vector.broadcast %19 : vector<8x1xf32> to vector<8x128xf32>
    %22 = vector.broadcast %20 : vector<1x128xf32> to vector<8x128xf32>
    %23 = arith.mulf %21, %22 : vector<8x128xf32>
    %24 = arith.addf %18, %23 : vector<8x128xf32>
    %25 = vector.extract_strided_slice %0 {offsets = [0, 4], sizes = [8, 1], strides = [1, 1]} : vector<8x8xf32> to vector<8x1xf32>
    %26 = vector.extract_strided_slice %1 {offsets = [4, 0], sizes = [1, 128], strides = [1, 1]} : vector<8x128xf32> to vector<1x128xf32>
    %27 = vector.broadcast %25 : vector<8x1xf32> to vector<8x128xf32>
    %28 = vector.broadcast %26 : vector<1x128xf32> to vector<8x128xf32>
    %29 = arith.mulf %27, %28 : vector<8x128xf32>
    %30 = arith.addf %24, %29 : vector<8x128xf32>
    %31 = vector.extract_strided_slice %0 {offsets = [0, 5], sizes = [8, 1], strides = [1, 1]} : vector<8x8xf32> to vector<8x1xf32>
    %32 = vector.extract_strided_slice %1 {offsets = [5, 0], sizes = [1, 128], strides = [1, 1]} : vector<8x128xf32> to vector<1x128xf32>
    %33 = vector.broadcast %31 : vector<8x1xf32> to vector<8x128xf32>
    %34 = vector.broadcast %32 : vector<1x128xf32> to vector<8x128xf32>
    %35 = arith.mulf %33, %34 : vector<8x128xf32>
    %36 = arith.addf %30, %35 : vector<8x128xf32>
    %37 = vector.extract_strided_slice %0 {offsets = [0, 6], sizes = [8, 1], strides = [1, 1]} : vector<8x8xf32> to vector<8x1xf32>
    %38 = vector.extract_strided_slice %1 {offsets = [6, 0], sizes = [1, 128], strides = [1, 1]} : vector<8x128xf32> to vector<1x128xf32>
    %39 = vector.broadcast %37 : vector<8x1xf32> to vector<8x128xf32>
    %40 = vector.broadcast %38 : vector<1x128xf32> to vector<8x128xf32>
    %41 = arith.mulf %39, %40 : vector<8x128xf32>
    %42 = arith.addf %36, %41 : vector<8x128xf32>
    %43 = vector.extract_strided_slice %0 {offsets = [0, 7], sizes = [8, 1], strides = [1, 1]} : vector<8x8xf32> to vector<8x1xf32>
    %44 = vector.extract_strided_slice %1 {offsets = [7, 0], sizes = [1, 128], strides = [1, 1]} : vector<8x128xf32> to vector<1x128xf32>
    %45 = vector.broadcast %43 : vector<8x1xf32> to vector<8x128xf32>
    %46 = vector.broadcast %44 : vector<1x128xf32> to vector<8x128xf32>
    %47 = arith.mulf %45, %46 : vector<8x128xf32>
    %48 = arith.addf %42, %47 : vector<8x128xf32>
    %c0_3 = arith.constant 0 : index
    %c0_4 = arith.constant 0 : index
    %49 = vector.load %arg3[%c0_3, %c0_4] : memref<1x128xf32, #tpu.memory_space<vmem>>, vector<1x128xf32>
    %50 = vector.broadcast %49 : vector<1x128xf32> to vector<8x128xf32>
    %51 = arith.addf %48, %50 : vector<8x128xf32>
    %cst = arith.constant 0.000000e+00 : f32
    %52 = vector.broadcast %cst : f32 to vector<8x128xf32>
    %53 = arith.maximumf %51, %52 : vector<8x128xf32>
    %54 = arith.truncf %53 : vector<8x128xf32> to vector<8x128xbf16>
    %c0_5 = arith.constant 0 : index
    %c0_6 = arith.constant 0 : index
    %55 = vector.load %arg4[%c0_5, %c0_6] : memref<128x128xbf16, #tpu.memory_space<vmem>>, vector<128x128xbf16>
    %cst_7 = arith.constant dense<0.000000e+00> : vector<8x128xf32>
    %56 = tpu.matmul %54, %55, %cst_7 {dimension_numbers = #tpu.dot_dimension_numbers<[1], [0], [0], [1], [0, 0, 1, 1], [], []>} : vector<8x128xbf16>, vector<128x128xbf16>, vector<8x128xf32> -> vector<8x128xf32>
    %c0_8 = arith.constant 0 : index
    %c0_9 = arith.constant 0 : index
    %57 = vector.load %arg5[%c0_8, %c0_9] : memref<1x128xf32, #tpu.memory_space<vmem>>, vector<1x128xf32>
    %58 = vector.broadcast %57 : vector<1x128xf32> to vector<8x128xf32>
    %59 = arith.addf %56, %58 : vector<8x128xf32>
    %cst_10 = arith.constant 0.000000e+00 : f32
    %60 = vector.broadcast %cst_10 : f32 to vector<8x128xf32>
    %61 = arith.maximumf %59, %60 : vector<8x128xf32>
    %62 = arith.truncf %61 : vector<8x128xf32> to vector<8x128xbf16>
    %c0_11 = arith.constant 0 : index
    %c0_12 = arith.constant 0 : index
    %63 = vector.load %arg6[%c0_11, %c0_12] : memref<128x128xbf16, #tpu.memory_space<vmem>>, vector<128x128xbf16>
    %cst_13 = arith.constant dense<0.000000e+00> : vector<8x128xf32>
    %64 = tpu.matmul %62, %63, %cst_13 {dimension_numbers = #tpu.dot_dimension_numbers<[1], [0], [0], [1], [0, 0, 1, 1], [], []>} : vector<8x128xbf16>, vector<128x128xbf16>, vector<8x128xf32> -> vector<8x128xf32>
    %c0_14 = arith.constant 0 : index
    %c0_15 = arith.constant 0 : index
    %65 = vector.load %arg7[%c0_14, %c0_15] : memref<1x128xf32, #tpu.memory_space<vmem>>, vector<1x128xf32>
    %66 = vector.broadcast %65 : vector<1x128xf32> to vector<8x128xf32>
    %67 = arith.addf %64, %66 : vector<8x128xf32>
    %c0_16 = arith.constant 0 : index
    %c0_17 = arith.constant 0 : index
    %68 = vector.load %arg8[%c0_16, %c0_17] : memref<8x128xf32, #tpu.memory_space<vmem>>, vector<8x128xf32>
    tpu.vector_store %arg8[%c0_16, %c0_17], %67 {strides = array<i32>} : memref<8x128xf32, #tpu.memory_space<vmem>>, vector<8x128xf32>,
    return
  }
  func.func @transform_0(%arg0: i32) -> (i32, i32) {
    %c0_i32 = arith.constant 0 : i32
    %c0_i32_0 = arith.constant 0 : i32
    return %arg0, %c0_i32 : i32, i32
  }
  func.func @transform_1(%arg0: i32) -> (i32, i32) {
    %c0_i32 = arith.constant 0 : i32
    %c0_i32_0 = arith.constant 0 : i32
    %c0_i32_1 = arith.constant 0 : i32
    return %c0_i32, %c0_i32_0 : i32, i32
  }
  func.func @transform_2(%arg0: i32) -> (i32, i32) {
    %c0_i32 = arith.constant 0 : i32
    %c0_i32_0 = arith.constant 0 : i32
    %c0_i32_1 = arith.constant 0 : i32
    return %c0_i32, %c0_i32_0 : i32, i32
  }
  func.func @transform_3(%arg0: i32) -> (i32, i32) {
    %c0_i32 = arith.constant 0 : i32
    %c0_i32_0 = arith.constant 0 : i32
    %c0_i32_1 = arith.constant 0 : i32
    return %c0_i32, %c0_i32_0 : i32, i32
  }
  func.func @transform_4(%arg0: i32) -> (i32, i32) {
    %c0_i32 = arith.constant 0 : i32
    %c0_i32_0 = arith.constant 0 : i32
    %c0_i32_1 = arith.constant 0 : i32
    return %c0_i32, %c0_i32_0 : i32, i32
  }
  func.func @transform_5(%arg0: i32) -> (i32, i32) {
    %c0_i32 = arith.constant 0 : i32
    %c0_i32_0 = arith.constant 0 : i32
    %c0_i32_1 = arith.constant 0 : i32
    return %c0_i32, %c0_i32_0 : i32, i32
  }
  func.func @transform_6(%arg0: i32) -> (i32, i32) {
    %c0_i32 = arith.constant 0 : i32
    %c0_i32_0 = arith.constant 0 : i32
    %c0_i32_1 = arith.constant 0 : i32
    return %c0_i32, %c0_i32_0 : i32, i32
  }
  func.func @transform_7(%arg0: i32) -> (i32, i32) {
    %c0_i32 = arith.constant 0 : i32
    %c0_i32_0 = arith.constant 0 : i32
    return %arg0, %c0_i32 : i32, i32
  }
}

</mosaic_0001>

<llo_original>
// kernel: _actor_critic_call.1
$region0: #{_actor_critic_call.1}
  #allocation0 [shape = 'u32[]', space=smem, size = 0x4, offset = 0x4, fixed_abs, tag = 'smem constant byte address 0x4 - core index']
  #allocation1 [shape = 'u32[144,128]{1,0:T(1,128)}', space=vmem, size = 0x12000, scoped, tag = 'internal scratch']
  %s0 = inlined_call_operand.hbm [shape: f32[8,8], index: 0, kind: input, shape index: {}]
  %s1 = inlined_call_operand.vmem [shape: f32[8,128], index: 1, kind: input, shape index: {}]
  %s2 = inlined_call_operand.vmem [shape: f32[1,128], index: 2, kind: input, shape index: {}]
  %s3 = inlined_call_operand.hbm [shape: bf16[128,128], index: 3, kind: input, shape index: {}]
  %s4 = inlined_call_operand.vmem [shape: f32[1,128], index: 4, kind: input, shape index: {}]
  %s5 = inlined_call_operand.hbm [shape: bf16[128,128], index: 5, kind: input, shape index: {}]
  %s6 = inlined_call_operand.vmem [shape: f32[1,128], index: 6, kind: input, shape index: {}]
  %s7 = inlined_call_operand.vmem [shape: f32[8,128], index: 7, kind: output, shape index: {}]
  %s8 = sld [smem:[#allocation0]]
  $region50: #{_actor_critic_call.1} parent=0
    _
  %s10 = ssub.s32 1, %s8
  %s11 = scalar_select 0, %s10, %s8
  $region1: #{_actor_critic_call.1} parent=0
    #allocation2 [shape = 'u8[4096]{0}', space=vmem, size = 0x1000, scoped, tag = 'input window, operand 0, single buffered']
    #allocation3 [shape = 's32[1]{0}', space=sflag, size = 0x4, scoped, tag = 'scoped memory for _actor_critic_call.1']
    #allocation4 [shape = 'u8[32768]{0}', space=vmem, size = 0x8000, scoped, tag = 'input window, operand 3, single buffered']
    #allocation5 [shape = 's32[1]{0}', space=sflag, size = 0x4, scoped, tag = 'scoped memory for _actor_critic_call.1']
    #allocation6 [shape = 'u8[32768]{0}', space=vmem, size = 0x8000, scoped, tag = 'input window, operand 5, single buffered']
    %12 = vsyncpa [#allocation3], 0
    %13 = vsyncpa [#allocation5], 0
    // Predicated region
    $region2: #{_actor_critic_call.1} parent=1 // pred_check
      _
    $region3: #{_actor_critic_call.1} parent=1 // pred_check_branch
      %15 = sbr.rel (0) target = $region5
    $region4: #{_actor_critic_call.1} parent=1 // pred_region
      %s17 = ssub.s32 128, 128
      %18 = vsyncadd [#allocation3], %s17
      %s20 = sshll.u32 [#allocation2], 4
      %s21 = int_to_ptr.vmem [resolvable:$true] %s20
      %23 = dma.hbm_to_vmem [thread:$0]  %s0, 128, %s21, [#allocation3]
    $region5: #{_actor_critic_call.1} parent=1 // pred_fallthru
      _
    // Predicated region
    $region6: #{_actor_critic_call.1} parent=1 // pred_check
      _
    $region7: #{_actor_critic_call.1} parent=1 // pred_check_branch
      %25 = sbr.rel (0) target = $region9
    $region8: #{_actor_critic_call.1} parent=1 // pred_region
      _
    $region9: #{_actor_critic_call.1} parent=1 // pred_fallthru
      _
    // Predicated region
    $region10: #{_actor_critic_call.1} parent=1 // pred_check
      _
    $region11: #{_actor_critic_call.1} parent=1 // pred_check_branch
      %27 = sbr.rel (0) target = $region13
    $region12: #{_actor_critic_call.1} parent=1 // pred_region
      _
    $region13: #{_actor_critic_call.1} parent=1 // pred_fallthru
      _
    // Predicated region
    $region14: #{_actor_critic_call.1} parent=1 // pred_check
      _
    $region15: #{_actor_critic_call.1} parent=1 // pred_check_branch
      %29 = sbr.rel (0) target = $region17
    $region16: #{_actor_critic_call.1} parent=1 // pred_region
      %s31 = ssub.s32 1024, 1024
      %32 = vsyncadd [#allocation5], %s31
      %s33 = sshll.u32 [#allocation4], 4
      %s34 = int_to_ptr.vmem [resolvable:$true] %s33
      %39 = dma.hbm_to_vmem [thread:$0]  %s3, 1024, %s34, [#allocation5], 64, 64, 4
    $region17: #{_actor_critic_call.1} parent=1 // pred_fallthru
      _
    // Predicated region
    $region18: #{_actor_critic_call.1} parent=1 // pred_check
      _
    $region19: #{_actor_critic_call.1} parent=1 // pred_check_branch
      %41 = sbr.rel (0) target = $region21
    $region20: #{_actor_critic_call.1} parent=1 // pred_region
      _
    $region21: #{_actor_critic_call.1} parent=1 // pred_fallthru
      _
    // Predicated region
    $region22: #{_actor_critic_call.1} parent=1 // pred_check
      _
    $region23: #{_actor_critic_call.1} parent=1 // pred_check_branch
      %43 = sbr.rel (0) target = $region25
    $region24: #{_actor_critic_call.1} parent=1 // pred_region
      %s45 = ssub.s32 1024, 1024
      %46 = vsyncadd [#allocation5], %s45
      %s47 = sshll.u32 [#allocation6], 4
      %s48 = int_to_ptr.vmem [resolvable:$true] %s47
      %53 = dma.hbm_to_vmem [thread:$0]  %s5, 1024, %s48, [#allocation5], 64, 64, 4
    $region25: #{_actor_critic_call.1} parent=1 // pred_fallthru
      _
    // Predicated region
    $region26: #{_actor_critic_call.1} parent=1 // pred_check
      _
    $region27: #{_actor_critic_call.1} parent=1 // pred_check_branch
      %55 = sbr.rel (0) target = $region29
    $region28: #{_actor_critic_call.1} parent=1 // pred_region
      _
    $region29: #{_actor_critic_call.1} parent=1 // pred_fallthru
      _
    // Predicated region
    $region30: #{_actor_critic_call.1} parent=1 // pred_check
      _
    $region31: #{_actor_critic_call.1} parent=1 // pred_check_branch
      %57 = sbr.rel (0) target = $region33
    $region32: #{_actor_critic_call.1} parent=1 // pred_region
      %58 = dma.done [#allocation3], 128
    $region33: #{_actor_critic_call.1} parent=1 // pred_fallthru
      _
    // Predicated region
    $region34: #{_actor_critic_call.1} parent=1 // pred_check
      _
    $region35: #{_actor_critic_call.1} parent=1 // pred_check_branch
      %60 = sbr.rel (0) target = $region37
    $region36: #{_actor_critic_call.1} parent=1 // pred_region
      %61 = dma.done [#allocation5], 1024
    $region37: #{_actor_critic_call.1} parent=1 // pred_fallthru
      _
    // Predicated region
    $region38: #{_actor_critic_call.1} parent=1 // pred_check
      _
    $region39: #{_actor_critic_call.1} parent=1 // pred_check_branch
      %63 = sbr.rel (0) target = $region41
    $region40: #{_actor_critic_call.1} parent=1 // pred_region
      %64 = dma.done [#allocation5], 1024
    $region41: #{_actor_critic_call.1} parent=1 // pred_fallthru
      _
    %v66 = vld [vmem:[#allocation2] sm:$0xff]
    %v67 = vld [vmem:[%s1] sm:$0xff]
    %69 = vset.pattern.permute.xlu0 0
    %70 = vperm.xlu0 %69, %v66
    %v71 = vpop.permute.xlu0 %70
    %v73 = vlaneseq
    %v74 = vshrl.u32 %v73, 7
    %v75 = vsub.s32 0, %v74
    %v76 = vrot.slane %v67, %v75
    %v77 = vmul.f32 %v71, %v76
    %78 = vset.pattern.permute.xlu0 1
    %79 = vperm.xlu0 %78, %v66
    %v80 = vpop.permute.xlu0 %79
    %v82 = vlaneseq
    %v83 = vshrl.u32 %v82, 7
    %v84 = vsub.s32 1, %v83
    %v85 = vrot.slane %v67, %v84
    %v86 = vmul.f32 %v80, %v85
    %v87 = vadd.f32 %v77, %v86
    %88 = vset.pattern.permute.xlu0 2
    %89 = vperm.xlu0 %88, %v66
    %v90 = vpop.permute.xlu0 %89
    %v92 = vlaneseq
    %v93 = vshrl.u32 %v92, 7
    %v94 = vsub.s32 2, %v93
    %v95 = vrot.slane %v67, %v94
    %v96 = vmul.f32 %v90, %v95
    %v97 = vadd.f32 %v87, %v96
    %98 = vset.pattern.permute.xlu0 3
    %99 = vperm.xlu0 %98, %v66
    %v100 = vpop.permute.xlu0 %99
    %v102 = vlaneseq
    %v103 = vshrl.u32 %v102, 7
    %v104 = vsub.s32 3, %v103
    %v105 = vrot.slane %v67, %v104
    %v106 = vmul.f32 %v100, %v105
    %v107 = vadd.f32 %v97, %v106
    %108 = vset.pattern.permute.xlu0 4
    %109 = vperm.xlu0 %108, %v66
    %v110 = vpop.permute.xlu0 %109
    %v112 = vlaneseq
    %v113 = vshrl.u32 %v112, 7
    %v114 = vsub.s32 4, %v113
    %v115 = vrot.slane %v67, %v114
    %v116 = vmul.f32 %v110, %v115
    %v117 = vadd.f32 %v107, %v116
    %118 = vset.pattern.permute.xlu0 5
    %119 = vperm.xlu0 %118, %v66
    %v120 = vpop.permute.xlu0 %119
    %v122 = vlaneseq
    %v123 = vshrl.u32 %v122, 7
    %v124 = vsub.s32 5, %v123
    %v125 = vrot.slane %v67, %v124
    %v126 = vmul.f32 %v120, %v125
    %v127 = vadd.f32 %v117, %v126
    %128 = vset.pattern.permute.xlu0 6
    %129 = vperm.xlu0 %128, %v66
    %v130 = vpop.permute.xlu0 %129
    %v132 = vlaneseq
    %v133 = vshrl.u32 %v132, 7
    %v134 = vsub.s32 6, %v133
    %v135 = vrot.slane %v67, %v134
    %v136 = vmul.f32 %v130, %v135
    %v137 = vadd.f32 %v127, %v136
    %138 = vset.pattern.permute.xlu0 7
    %139 = vperm.xlu0 %138, %v66
    %v140 = vpop.permute.xlu0 %139
    %v142 = vlaneseq
    %v143 = vshrl.u32 %v142, 7
    %v144 = vsub.s32 7, %v143
    %v145 = vrot.slane %v67, %v144
    %v146 = vmul.f32 %v140, %v145
    %v147 = vadd.f32 %v137, %v146
    %v148 = vld [vmem:[%s2] sm:$0x1]
    %v150 = vlaneseq
    %v151 = vshrl.u32 %v150, 7
    %v152 = vsub.s32 0, %v151
    %v153 = vrot.slane %v148, %v152
    %v155 = vadd.f32 %v147, %v153
    %v156 = vmax.f32 %v155, 0.0
    %v157 = vpack.c.bf16 %v156, %v156
    %v158 = vld [vmem:[#allocation4] sm:$0xf]
    %v159 = vld [vmem:[#allocation4 + $0x4] sm:$0xf]
    %v160 = vld [vmem:[#allocation4 + $0x8] sm:$0xf]
    %v161 = vld [vmem:[#allocation4 + $0xc] sm:$0xf]
    %v162 = vld [vmem:[#allocation4 + $0x10] sm:$0xf]
    %v163 = vld [vmem:[#allocation4 + $0x14] sm:$0xf]
    %v164 = vld [vmem:[#allocation4 + $0x18] sm:$0xf]
    %v165 = vld [vmem:[#allocation4 + $0x1c] sm:$0xf]
    %v166 = vld [vmem:[#allocation4 + $0x20] sm:$0xf]
    %v167 = vld [vmem:[#allocation4 + $0x24] sm:$0xf]
    %v168 = vld [vmem:[#allocation4 + $0x28] sm:$0xf]
    %v169 = vld [vmem:[#allocation4 + $0x2c] sm:$0xf]
    %v170 = vld [vmem:[#allocation4 + $0x30] sm:$0xf]
    %v171 = vld [vmem:[#allocation4 + $0x34] sm:$0xf]
    %v172 = vld [vmem:[#allocation4 + $0x38] sm:$0xf]
    %v173 = vld [vmem:[#allocation4 + $0x3c] sm:$0xf]
    %v174 = vld [vmem:[%s4] sm:$0x1]
    %v176 = vlaneseq
    %v177 = vshrl.u32 %v176, 7
    %v178 = vsub.s32 0, %v177
    %v179 = vrot.slane %v174, %v178
    %v197 = vunpack.c.l.b16 %v158
    %v198 = vunpack.c.l.b16 %v159
    %v199 = vunpack.c.l.b16 %v160
    %v200 = vunpack.c.l.b16 %v161
    %v201 = vunpack.c.l.b16 %v162
    %v202 = vunpack.c.l.b16 %v163
    %v203 = vunpack.c.l.b16 %v164
    %v204 = vunpack.c.l.b16 %v165
    %v205 = vunpack.c.l.b16 %v166
    %v206 = vunpack.c.l.b16 %v167
    %v207 = vunpack.c.l.b16 %v168
    %v208 = vunpack.c.l.b16 %v169
    %v209 = vunpack.c.l.b16 %v170
    %v210 = vunpack.c.l.b16 %v171
    %v211 = vunpack.c.l.b16 %v172
    %v212 = vunpack.c.l.b16 %v173
    %v213 = vpack.c.b16 %v198, %v197
    %v214 = vpack.c.b16 %v200, %v199
    %v215 = vpack.c.b16 %v202, %v201
    %v216 = vpack.c.b16 %v204, %v203
    %v217 = vpack.c.b16 %v206, %v205
    %v218 = vpack.c.b16 %v208, %v207
    %v219 = vpack.c.b16 %v210, %v209
    %v220 = vpack.c.b16 %v212, %v211
    %229 = vmatprep.subr.bf16.mxu0 0
    %230 = vmatpush1.bf16.msra.mxu0 %v213
    %231 = vmatprep.subr.bf16.mxu0 0
    %232 = vmatpush1.bf16.msra.mxu0 %v214
    %233 = vmatprep.subr.bf16.mxu0 0
    %234 = vmatpush1.bf16.msra.mxu0 %v215
    %235 = vmatprep.subr.bf16.mxu0 0
    %236 = vmatpush1.bf16.msra.mxu0 %v216
    %237 = vmatprep.subr.bf16.mxu0 0
    %238 = vmatpush1.bf16.msra.mxu0 %v217
    %239 = vmatprep.subr.bf16.mxu0 0
    %240 = vmatpush1.bf16.msra.mxu0 %v218
    %241 = vmatprep.subr.bf16.mxu0 0
    %242 = vmatpush1.bf16.msra.mxu0 %v219
    %243 = vmatprep.subr.bf16.mxu0 0
    %244 = vmatpush1.bf16.msra.mxu0 %v220
    %245 = vmatprep.subr.bf16.mxu0 0
    %246 = vmatpush1.bf16.msra.mxu0 0
    %247 = vmatprep.subr.bf16.mxu0 0
    %248 = vmatpush1.bf16.msra.mxu0 0
    %249 = vmatprep.subr.bf16.mxu0 0
    %250 = vmatpush1.bf16.msra.mxu0 0
    %251 = vmatprep.subr.bf16.mxu0 0
    %252 = vmatpush1.bf16.msra.mxu0 0
    %253 = vmatprep.subr.bf16.mxu0 0
    %254 = vmatpush1.bf16.msra.mxu0 0
    %255 = vmatprep.subr.bf16.mxu0 0
    %256 = vmatpush1.bf16.msra.mxu0 0
    %257 = vmatprep.subr.bf16.mxu0 0
    %258 = vmatpush1.bf16.msra.mxu0 0
    %259 = vmatprep.subr.bf16.mxu0 0
    %260 = vmatpush1.bf16.msra.mxu0 0
    %261 = vmatprep.mubr.bf16.mxu0 0
    %262 = vmatmul.mubr.bf16.gmra.mrb[0].mxu0 %v157
    %v263 = vpop.f32.mrb[0].mxu0
    %v264 = vadd.f32 %v179, %v263
    %v265 = vpop.f32.mrb[0].mxu0
    %v266 = vpop.f32.mrb[0].mxu0
    %v267 = vpop.f32.mrb[0].mxu0
    %268 = vdwg.mxu0
    %v269 = vmax.f32 %v264, 0.0
    %v270 = vpack.c.bf16 %v269, %v269
    %v271 = vld [vmem:[#allocation6] sm:$0xf]
    %v272 = vld [vmem:[#allocation6 + $0x4] sm:$0xf]
    %v273 = vld [vmem:[#allocation6 + $0x8] sm:$0xf]
    %v274 = vld [vmem:[#allocation6 + $0xc] sm:$0xf]
    %v275 = vld [vmem:[#allocation6 + $0x10] sm:$0xf]
    %v276 = vld [vmem:[#allocation6 + $0x14] sm:$0xf]
    %v277 = vld [vmem:[#allocation6 + $0x18] sm:$0xf]
    %v278 = vld [vmem:[#allocation6 + $0x1c] sm:$0xf]
    %v279 = vld [vmem:[#allocation6 + $0x20] sm:$0xf]
    %v280 = vld [vmem:[#allocation6 + $0x24] sm:$0xf]
    %v281 = vld [vmem:[#allocation6 + $0x28] sm:$0xf]
    %v282 = vld [vmem:[#allocation6 + $0x2c] sm:$0xf]
    %v283 = vld [vmem:[#allocation6 + $0x30] sm:$0xf]
    %v284 = vld [vmem:[#allocation6 + $0x34] sm:$0xf]
    %v285 = vld [vmem:[#allocation6 + $0x38] sm:$0xf]
    %v286 = vld [vmem:[#allocation6 + $0x3c] sm:$0xf]
    %v287 = vld [vmem:[%s6] sm:$0x1]
    %v289 = vlaneseq
    %v290 = vshrl.u32 %v289, 7
    %v291 = vsub.s32 0, %v290
    %v292 = vrot.slane %v287, %v291
    %v310 = vunpack.c.l.b16 %v271
    %v311 = vunpack.c.l.b16 %v272
    %v312 = vunpack.c.l.b16 %v273
    %v313 = vunpack.c.l.b16 %v274
    %v314 = vunpack.c.l.b16 %v275
    %v315 = vunpack.c.l.b16 %v276
    %v316 = vunpack.c.l.b16 %v277
    %v317 = vunpack.c.l.b16 %v278
    %v318 = vunpack.c.l.b16 %v279
    %v319 = vunpack.c.l.b16 %v280
    %v320 = vunpack.c.l.b16 %v281
    %v321 = vunpack.c.l.b16 %v282
    %v322 = vunpack.c.l.b16 %v283
    %v323 = vunpack.c.l.b16 %v284
    %v324 = vunpack.c.l.b16 %v285
    %v325 = vunpack.c.l.b16 %v286
    %v326 = vpack.c.b16 %v311, %v310
    %v327 = vpack.c.b16 %v313, %v312
    %v328 = vpack.c.b16 %v315, %v314
    %v329 = vpack.c.b16 %v317, %v316
    %v330 = vpack.c.b16 %v319, %v318
    %v331 = vpack.c.b16 %v321, %v320
    %v332 = vpack.c.b16 %v323, %v322
    %v333 = vpack.c.b16 %v325, %v324
    %342 = vmatprep.subr.bf16.mxu0 0
    %343 = vmatpush1.bf16.msra.mxu0 %v326
    %344 = vmatprep.subr.bf16.mxu0 0
    %345 = vmatpush1.bf16.msra.mxu0 %v327
    %346 = vmatprep.subr.bf16.mxu0 0
    %347 = vmatpush1.bf16.msra.mxu0 %v328
    %348 = vmatprep.subr.bf16.mxu0 0
    %349 = vmatpush1.bf16.msra.mxu0 %v329
    %350 = vmatprep.subr.bf16.mxu0 0
    %351 = vmatpush1.bf16.msra.mxu0 %v330
    %352 = vmatprep.subr.bf16.mxu0 0
    %353 = vmatpush1.bf16.msra.mxu0 %v331
    %354 = vmatprep.subr.bf16.mxu0 0
    %355 = vmatpush1.bf16.msra.mxu0 %v332
    %356 = vmatprep.subr.bf16.mxu0 0
    %357 = vmatpush1.bf16.msra.mxu0 %v333
    %358 = vmatprep.subr.bf16.mxu0 0
    %359 = vmatpush1.bf16.msra.mxu0 0
    %360 = vmatprep.subr.bf16.mxu0 0
    %361 = vmatpush1.bf16.msra.mxu0 0
    %362 = vmatprep.subr.bf16.mxu0 0
    %363 = vmatpush1.bf16.msra.mxu0 0
    %364 = vmatprep.subr.bf16.mxu0 0
    %365 = vmatpush1.bf16.msra.mxu0 0
    %366 = vmatprep.subr.bf16.mxu0 0
    %367 = vmatpush1.bf16.msra.mxu0 0
    %368 = vmatprep.subr.bf16.mxu0 0
    %369 = vmatpush1.bf16.msra.mxu0 0
    %370 = vmatprep.subr.bf16.mxu0 0
    %371 = vmatpush1.bf16.msra.mxu0 0
    %372 = vmatprep.subr.bf16.mxu0 0
    %373 = vmatpush1.bf16.msra.mxu0 0
    %374 = vmatprep.mubr.bf16.mxu0 0
    %375 = vmatmul.mubr.bf16.gmra.mrb[0].mxu0 %v270
    %v376 = vpop.f32.mrb[0].mxu0
    %v377 = vadd.f32 %v292, %v376
    %v378 = vpop.f32.mrb[0].mxu0
    %v379 = vpop.f32.mrb[0].mxu0
    %v380 = vpop.f32.mrb[0].mxu0
    %381 = vdwg.mxu0
    %382 = vst [vmem:[%s7] sm:$0xff] %v377
    // Predicated region
    $region42: #{_actor_critic_call.1} parent=1 // pred_check
      _
    $region43: #{_actor_critic_call.1} parent=1 // pred_check_branch
      %384 = sbr.rel (0) target = $region45
    $region44: #{_actor_critic_call.1} parent=1 // pred_region
      _
    $region45: #{_actor_critic_call.1} parent=1 // pred_fallthru
      _
    // Predicated region
    $region46: #{_actor_critic_call.1} parent=1 // pred_check
      _
    $region47: #{_actor_critic_call.1} parent=1 // pred_check_branch
      %386 = sbr.rel (0) target = $region49
    $region48: #{_actor_critic_call.1} parent=1 // pred_region
      _
    $region49: #{_actor_critic_call.1} parent=1 // pred_fallthru
      _
    %387 = vsyncpa [#allocation3], 1
    %388 = vsyncpa [#allocation5], 1

</llo_original>
